<compile_context>
chip_gen: v7x
topology: tpu7x:2x2x1
jax: 0.10.0
libtpu: 0.0.40
codegen_flags: <defaults>
</compile_context>

<pallas_src>
import functools
import math

import jax
import jax.numpy as jnp
from jax import lax
from jax.experimental import pallas as pl
from jax.experimental.pallas import tpu as pltpu


# ----------------------------------------------------------------------------
# Kernel
# ----------------------------------------------------------------------------
def _lstm_kernel(x_ref, wih_ref, whh_ref, bias_ref, h0_ref, c0_ref,
                 out_ref, hN_ref, cN_ref,
                 gx_sc, h_sc, c_sc,
                 *, t_total, needs_mask, unroll):
    t_blk = pl.program_id(1)
    t_b = x_ref.shape[0]
    H = h_sc.shape[-1]

    @pl.when(t_blk == 0)
    def _():
        h_sc[...] = h0_ref[...]
        c_sc[...] = c0_ref[...]

    wih = wih_ref[...]            # (D, 4H) bf16
    whh = whh_ref[...]            # (H, 4H) bf16
    bias = bias_ref[...]          # (1, 4H) f32

    # Non-recurrent input projection for the whole time block.  These matmuls
    # do not depend on the carried state, so they run ahead of / overlap with
    # the serial recurrence below.
    @pl.loop(0, t_b)
    def _(t):
        gx_sc[t] = jnp.dot(x_ref[t], wih,
                           preferred_element_type=jnp.float32) + bias

    def step(t, carry):
        h_prev, c_prev = carry
        gates = gx_sc[t] + jnp.dot(h_prev.astype(jnp.bfloat16), whh,
                                   preferred_element_type=jnp.float32)
        # sigmoid(x) = 0.5 * (tanh(0.5 x) + 1): one EUP op per gate, not two.
        i_g = 0.5 * (jnp.tanh(0.5 * gates[:, 0 * H:1 * H]) + 1.0)
        f_g = 0.5 * (jnp.tanh(0.5 * gates[:, 1 * H:2 * H]) + 1.0)
        g_g = jnp.tanh(gates[:, 2 * H:3 * H])
        o_g = 0.5 * (jnp.tanh(0.5 * gates[:, 3 * H:4 * H]) + 1.0)
        c_new = f_g * c_prev + i_g * g_g
        h_new = o_g * jnp.tanh(c_new)
        out_ref[t] = h_new.astype(out_ref.dtype)
        if needs_mask:
            # Padded timesteps (global index >= t_total) must not update state.
            g_t = t_blk * t_b + t
            valid = jnp.minimum(jnp.maximum(t_total - g_t, 0), 1).astype(jnp.float32)
            h_new = h_prev + valid * (h_new - h_prev)
            c_new = c_prev + valid * (c_new - c_prev)
        return h_new, c_new

    h, c = lax.fori_loop(0, t_b, step, (h_sc[...], c_sc[...]), unroll=unroll)
    h_sc[...] = h
    c_sc[...] = c

    @pl.when(t_blk == pl.num_programs(1) - 1)
    def _():
        hN_ref[...] = h.astype(hN_ref.dtype)
        cN_ref[...] = c.astype(cN_ref.dtype)


# ----------------------------------------------------------------------------
# Tile sizing / wrapper
# ----------------------------------------------------------------------------
def _round_up(n, m):
    return ((n + m - 1) // m) * m


def _vmem_budget_bytes():
    try:
        phys = int(getattr(pltpu.get_tpu_info(), "vmem_capacity_bytes",
                           64 * 1024 * 1024))
    except Exception:
        phys = 64 * 1024 * 1024       # assume v7x per-TensorCore VMEM (tightest)
    return max(32 * 1024 * 1024, int(phys * 0.75))


def _estimate_vmem_bytes(t_b, b_t, D, H, out_bytes):
    x_blk = 2 * t_b * b_t * D * 2               # bf16 input block, double-buffered
    out_blk = 2 * t_b * b_t * H * out_bytes     # output block, double-buffered
    gx = t_b * b_t * 4 * H * 4                  # f32 gates scratch
    w = 2 * (D * 4 * H + H * 4 * H) * 2         # bf16 weights, double-buffered
    small = 4 * 2 * b_t * H * 4 + 2 * b_t * H * 4 + 2 * 4 * H * 4
    return x_blk + out_blk + gx + w + small


def _choose_tiles(T, B, D, H, t_block, b_tile, out_bytes):
    budget = _vmem_budget_bytes()

    # --- batch tile: multiple of 8, large M for the MXU, >=2 tiles when the
    # batch is big enough so both v7x TensorCores get work ---------------------
    if b_tile is not None:
        b_t = _round_up(max(1, min(b_tile, _round_up(B, 8))), 8)
    else:
        b_pad = _round_up(B, 8)
        if b_pad <= 16:
            b_t = b_pad
        elif b_pad <= 512:
            b_t = _round_up((b_pad + 1) // 2, 8)
        else:
            b_t = 256

    # --- time block: keep >= 8 (amortize per-grid-step overhead) while
    # minimizing padding; never degenerates to 1 for awkward T -----------------
    if t_block is not None:
        t_b = max(1, min(t_block, T))
    elif T <= 16:
        t_b = T
    else:
        best = None
        for cand in range(8, 33):
            waste = (-T) % cand
            if best is None or waste < best[0] or (waste == best[0] and cand > best[1]):
                best = (waste, cand)
        t_b = best[1]

    # --- shrink until the block working set fits the scoped-VMEM budget -------
    while (_estimate_vmem_bytes(t_b, b_t, D, H, out_bytes) > 0.8 * budget
           and (t_b > 8 or b_t > 8)):
        if t_b > 8:
            t_b = max(8, t_b // 2)
        else:
            b_t = max(8, _round_up(b_t // 2, 8))

    return t_b, b_t, budget


def _lstm_forward_impl(x, wih_bf, whh_bf, bias, h0, c0, *,
                       t_block=None, b_tile=None, out_dtype=jnp.float32):
    """x: (T,B,D); wih_bf: (D,4H) bf16; whh_bf: (H,4H) bf16; bias: (4H,) f32;
    h0, c0: (B,H). Returns (out (T,B,H), (h_N, c_N))."""
    T, B, D = x.shape
    H = h0.shape[-1]
    out_bytes = jnp.dtype(out_dtype).itemsize

    t_b, b_t, vmem_budget = _choose_tiles(T, B, D, H, t_block, b_tile, out_bytes)
    T_pad = _round_up(T, t_b)
    B_pad = _round_up(B, b_t)

    x = x.astype(jnp.bfloat16)
    if T_pad != T or B_pad != B:
        x = jnp.pad(x, ((0, T_pad - T), (0, B_pad - B), (0, 0)))
    h0f = h0.astype(jnp.float32)
    c0f = c0.astype(jnp.float32)
    if B_pad != B:
        h0f = jnp.pad(h0f, ((0, B_pad - B), (0, 0)))
        c0f = jnp.pad(c0f, ((0, B_pad - B), (0, 0)))
    bias2 = bias.reshape(1, 4 * H).astype(jnp.float32)

    grid = (B_pad // b_t, T_pad // t_b)   # batch tiles (parallel) x time (serial)

    kernel = functools.partial(_lstm_kernel,
                               t_total=T,
                               needs_mask=(T_pad != T),
                               unroll=max(1, min(4, t_b)))

    out_shapes = (jax.ShapeDtypeStruct((T_pad, B_pad, H), out_dtype),
                  jax.ShapeDtypeStruct((B_pad, H), jnp.float32),
                  jax.ShapeDtypeStruct((B_pad, H), jnp.float32))

    grid_spec = pltpu.PrefetchScalarGridSpec(
        num_scalar_prefetch=0,
        grid=grid,
        in_specs=[
            pl.BlockSpec((t_b, b_t, D), lambda b, t: (t, b, 0)),    # x (bf16)
            pl.BlockSpec((D, 4 * H), lambda b, t: (0, 0)),          # W_ih^T (bf16)
            pl.BlockSpec((H, 4 * H), lambda b, t: (0, 0)),          # W_hh^T (bf16)
            pl.BlockSpec((1, 4 * H), lambda b, t: (0, 0)),          # fused bias
            pl.BlockSpec((b_t, H), lambda b, t: (b, 0)),            # h0
            pl.BlockSpec((b_t, H), lambda b, t: (b, 0)),            # c0
        ],
        out_specs=[
            pl.BlockSpec((t_b, b_t, H), lambda b, t: (t, b, 0)),    # out sequence
            pl.BlockSpec((b_t, H), lambda b, t: (b, 0)),            # h_N
            pl.BlockSpec((b_t, H), lambda b, t: (b, 0)),            # c_N
        ],
        scratch_shapes=[pltpu.VMEM((t_b, b_t, 4 * H), jnp.float32),  # gates_x blk
                        pltpu.VMEM((b_t, H), jnp.float32),           # h carry
                        pltpu.VMEM((b_t, H), jnp.float32)],          # c carry
    )

    out, hN, cN = pl.pallas_call(
        kernel,
        out_shape=out_shapes,
        grid_spec=grid_spec,
        compiler_params=pltpu.CompilerParams(
            dimension_semantics=("parallel", "arbitrary"),
            vmem_limit_bytes=vmem_budget),
    )(x, wih_bf, whh_bf, bias2, h0f, c0f)

    if T_pad != T or B_pad != B:
        out = out[:T, :B]
        hN = hN[:B]
        cN = cN[:B]
    return out, (hN, cN)


lstm_forward_pallas = jax.jit(_lstm_forward_impl,
                              static_argnames=("t_block", "b_tile", "out_dtype"))


def lstm_forward_ref(x, w_ih, w_hh, b_ih, b_hh, h0, c0):
    """Pure-JAX f32 reference (lax.scan) with PyTorch nn.LSTM semantics."""
    H = h0.shape[-1]
    b = b_ih + b_hh

    def step(carry, x_t):
        h, c = carry
        gates = x_t @ w_ih.T + h @ w_hh.T + b
        i = jax.nn.sigmoid(gates[:, 0 * H:1 * H])
        f = jax.nn.sigmoid(gates[:, 1 * H:2 * H])
        g = jnp.tanh(gates[:, 2 * H:3 * H])
        o = jax.nn.sigmoid(gates[:, 3 * H:4 * H])
        c = f * c + i * g
        h = o * jnp.tanh(c)
        return (h, c), h

    (hN, cN), out = jax.lax.scan(step, (h0, c0), x)
    return out, (hN, cN)


# ----------------------------------------------------------------------------
# Module
# ----------------------------------------------------------------------------
class Memory:
    """JAX/Pallas port of rsl_rl Memory (type='lstm', num_layers=1).

    hidden_size should preferably be a multiple of 128 (default 256) so the
    output lane dim is vreg-dense; smaller H still runs correctly (masked
    stores), it is only slower.
    """

    def __init__(self, input_size, type='lstm', num_layers=1, hidden_size=256, key=None):
        if type.lower() != 'lstm' or num_layers != 1:
            # TODO(synk): GRU / multi-layer stacks not implemented in this kernel.
            raise NotImplementedError("only single-layer LSTM is implemented")
        self.input_size = input_size
        self.hidden_size = hidden_size
        key = jax.random.PRNGKey(0) if key is None else key
        k = 1.0 / math.sqrt(hidden_size)   # PyTorch nn.LSTM default init: U(-k, k)
        k1, k2, k3, k4 = jax.random.split(key, 4)
        H, D = hidden_size, input_size
        self.w_ih = jax.random.uniform(k1, (4 * H, D), jnp.float32, -k, k)
        self.w_hh = jax.random.uniform(k2, (4 * H, H), jnp.float32, -k, k)
        self.b_ih = jax.random.uniform(k3, (4 * H,), jnp.float32, -k, k)
        self.b_hh = jax.random.uniform(k4, (4 * H,), jnp.float32, -k, k)
        # Precomputed once: transposed bf16 weights + fused f32 bias.
        self.wih_bf = self.w_ih.T.astype(jnp.bfloat16)   # (D, 4H)
        self.whh_bf = self.w_hh.T.astype(jnp.bfloat16)   # (H, 4H)
        self.bias = (self.b_ih + self.b_hh).astype(jnp.float32)   # (4H,)
        self.hidden_states = None

    def forward(self, input, masks=None, hidden_states=None):
        batch_mode = masks is not None
        if batch_mode:
            if hidden_states is None:
                raise ValueError('Hidden states not passed to memory module during policy update')
            h0, c0 = hidden_states          # each (1, B, H)
            out, _ = lstm_forward_pallas(input, self.wih_bf, self.whh_bf, self.bias,
                                         h0[0], c0[0])
            # TODO(synk): unpad_trajectories (rsl_rl.utils) depends on the external
            # padding convention; padded sequence output is returned as-is.
            return out
        else:
            x = input[None]                  # (1, B, D)
            B = input.shape[0]
            if (self.hidden_states is not None
                    and self.hidden_states[0].shape[-2] != B):
                self.hidden_states = None    # batch size changed: reinitialize
            if self.hidden_states is None:
                h0 = jnp.zeros((B, self.hidden_size), jnp.float32)
                c0 = jnp.zeros((B, self.hidden_size), jnp.float32)
            else:
                h0, c0 = self.hidden_states[0][0], self.hidden_states[1][0]
            out, (hN, cN) = lstm_forward_pallas(x, self.wih_bf, self.whh_bf, self.bias,
                                                h0, c0)
            self.hidden_states = (hN[None], cN[None])
            return out

    def reset(self, dones=None):
        if self.hidden_states is None:
            return
        if dones is None:
            self.hidden_states = tuple(jnp.zeros_like(hs) for hs in self.hidden_states)
            return
        dones = jnp.asarray(dones)
        if dones.dtype == jnp.bool_:
            self.hidden_states = tuple(
                jnp.where(dones[None, :, None], 0.0, hs) for hs in self.hidden_states)
        else:
            self.hidden_states = tuple(
                hs.at[:, dones, :].set(0.0) for hs in self.hidden_states)


if __name__ == "__main__":
    key = jax.random.PRNGKey(0)
    k_in, k_seq, k_param, k_h, k_c, k_seq2 = jax.random.split(key, 6)

    T, B, D, H = 8, 16, 16, 32
    RTOL, ATOL = 3e-2, 3e-2   # bf16 matmuls inside the kernel
    mem = Memory(input_size=D, hidden_size=H, key=k_param)

    # --- inference mode (masks=None): two successive single-step calls ---
    x1 = jax.random.normal(k_in, (B, D), jnp.float32)
    out1 = mem.forward(x1)
    out2 = mem.forward(x1 * 0.5)
    jax.block_until_ready(out2)
    assert out1.shape == (1, B, H) and out2.shape == (1, B, H)

    # cross-check: two single-step kernel calls == T=2 reference scan
    xs2 = jnp.stack([x1, x1 * 0.5], axis=0)
    ref2, _ = lstm_forward_ref(xs2, mem.w_ih, mem.w_hh, mem.b_ih, mem.b_hh,
                               jnp.zeros((B, H), jnp.float32),
                               jnp.zeros((B, H), jnp.float32))
    assert jnp.allclose(out2[0], ref2[1], rtol=RTOL, atol=ATOL), (
        float(jnp.max(jnp.abs(out2[0] - ref2[1]))))

    mem.reset(dones=jnp.array([0, 3]))   # exercise episode-boundary reset

    # --- batch (sequence) mode: full-sequence kernel vs pure-JAX reference ---
    xs = jax.random.normal(k_seq, (T, B, D), jnp.float32)
    h0 = 0.1 * jax.random.normal(k_h, (1, B, H), jnp.float32)
    c0 = 0.1 * jax.random.normal(k_c, (1, B, H), jnp.float32)
    out_ref, (hN_r, cN_r) = lstm_forward_ref(xs, mem.w_ih, mem.w_hh,
                                             mem.b_ih, mem.b_hh, h0[0], c0[0])

    # default blocking
    out_p1 = mem.forward(xs, masks=jnp.ones((T, B), jnp.float32),
                         hidden_states=(h0, c0))
    # explicit multi-block grid: 2 batch tiles x 2 time blocks
    out_p2, (hN_p, cN_p) = lstm_forward_pallas(xs, mem.wih_bf, mem.whh_bf, mem.bias,
                                               h0[0], c0[0], t_block=4, b_tile=8)
    jax.block_until_ready((out_p1, out_p2, hN_p, cN_p))

    assert out_p1.shape == (T, B, H) and out_p2.shape == (T, B, H)
    assert jnp.allclose(out_p1, out_ref, rtol=RTOL, atol=ATOL), (
        float(jnp.max(jnp.abs(out_p1 - out_ref))))
    assert jnp.allclose(out_p2, out_ref, rtol=RTOL, atol=ATOL), (
        float(jnp.max(jnp.abs(out_p2 - out_ref))))
    assert jnp.allclose(hN_p, hN_r, rtol=RTOL, atol=ATOL)
    assert jnp.allclose(cN_p, cN_r, rtol=RTOL, atol=ATOL)

    # --- ragged time: T not a multiple of the time block (exercises masking) ---
    T2 = 10
    xs3 = jax.random.normal(k_seq2, (T2, B, D), jnp.float32)
    out_r3, (hN_r3, cN_r3) = lstm_forward_ref(xs3, mem.w_ih, mem.w_hh,
                                              mem.b_ih, mem.b_hh, h0[0], c0[0])
    out_p3, (hN_p3, cN_p3) = lstm_forward_pallas(xs3, mem.wih_bf, mem.whh_bf, mem.bias,
                                                 h0[0], c0[0], t_block=4)
    jax.block_until_ready((out_p3, hN_p3, cN_p3))
    assert out_p3.shape == (T2, B, H)
    assert jnp.allclose(out_p3, out_r3, rtol=RTOL, atol=ATOL), (
        float(jnp.max(jnp.abs(out_p3 - out_r3))))
    assert jnp.allclose(hN_p3, hN_r3, rtol=RTOL, atol=ATOL)
    assert jnp.allclose(cN_p3, cN_r3, rtol=RTOL, atol=ATOL)

    print("KERNEL_OK")
</pallas_src>

<mosaic_0001>
module attributes {stable_mosaic.version = 11 : i64} {
  func.func @_lstm_kernel(%arg0: i32, %arg1: i32, %arg2: memref<1x16x16xbf16, #tpu.memory_space<vmem>>, %arg3: memref<16x128xbf16, #tpu.memory_space<vmem>>, %arg4: memref<32x128xbf16, #tpu.memory_space<vmem>>, %arg5: memref<1x128xf32, #tpu.memory_space<vmem>>, %arg6: memref<16x32xf32, #tpu.memory_space<vmem>>, %arg7: memref<16x32xf32, #tpu.memory_space<vmem>>, %arg8: memref<1x16x32xf32, #tpu.memory_space<vmem>>, %arg9: memref<16x32xf32, #tpu.memory_space<vmem>>, %arg10: memref<16x32xf32, #tpu.memory_space<vmem>>, %arg11: memref<1x16x128xf32, #tpu.memory_space<vmem>>, %arg12: memref<16x32xf32, #tpu.memory_space<vmem>>, %arg13: memref<16x32xf32, #tpu.memory_space<vmem>>) attributes {dimension_semantics = [#tpu.dimension_semantics<parallel>, #tpu.dimension_semantics<arbitrary>], iteration_bounds = array<i64: 1, 1>, scalar_prefetch = 0 : i64, scratch_operands = 3 : i64, tpu.core_type = #tpu.core_type<tc>, window_params = [{transform_indices = @transform_0, window_bounds = array<i64: 1, 16, 16>}, {pipeline_mode = #tpu.pipeline_mode<synchronous>, transform_indices = @transform_1, window_bounds = array<i64: 16, 128>}, {pipeline_mode = #tpu.pipeline_mode<synchronous>, transform_indices = @transform_2, window_bounds = array<i64: 32, 128>}, {pipeline_mode = #tpu.pipeline_mode<synchronous>, transform_indices = @transform_3, window_bounds = array<i64: 1, 128>}, {transform_indices = @transform_4, window_bounds = array<i64: 16, 32>}, {transform_indices = @transform_5, window_bounds = array<i64: 16, 32>}, {transform_indices = @transform_6, window_bounds = array<i64: 1, 16, 32>}, {transform_indices = @transform_7, window_bounds = array<i64: 16, 32>}, {transform_indices = @transform_8, window_bounds = array<i64: 16, 32>}]} {
    %c0_i32 = arith.constant 0 : i32
    %0 = arith.cmpi eq, %arg1, %c0_i32 : i32
    %1 = arith.extui %0 : i1 to i32
    %c0_i32_0 = arith.constant 0 : i32
    %2 = arith.cmpi ne, %1, %c0_i32_0 : i32
    scf.if %2 {
      %c0_39 = arith.constant 0 : index
      %c0_40 = arith.constant 0 : index
      %66 = vector.load %arg6[%c0_39, %c0_40] : memref<16x32xf32, #tpu.memory_space<vmem>>, vector<16x32xf32>
      %c0_41 = arith.constant 0 : index
      %c0_42 = arith.constant 0 : index
      %67 = vector.load %arg12[%c0_41, %c0_42] : memref<16x32xf32, #tpu.memory_space<vmem>>, vector<16x32xf32>
      tpu.vector_store %arg12[%c0_41, %c0_42], %66 {strides = array<i32>} : memref<16x32xf32, #tpu.memory_space<vmem>>, vector<16x32xf32>,
      %c0_43 = arith.constant 0 : index
      %c0_44 = arith.constant 0 : index
      %68 = vector.load %arg7[%c0_43, %c0_44] : memref<16x32xf32, #tpu.memory_space<vmem>>, vector<16x32xf32>
      %c0_45 = arith.constant 0 : index
      %c0_46 = arith.constant 0 : index
      %69 = vector.load %arg13[%c0_45, %c0_46] : memref<16x32xf32, #tpu.memory_space<vmem>>, vector<16x32xf32>
      tpu.vector_store %arg13[%c0_45, %c0_46], %68 {strides = array<i32>} : memref<16x32xf32, #tpu.memory_space<vmem>>, vector<16x32xf32>,
    } else {
    }
    %c0 = arith.constant 0 : index
    %c0_1 = arith.constant 0 : index
    %3 = vector.load %arg3[%c0, %c0_1] : memref<16x128xbf16, #tpu.memory_space<vmem>>, vector<16x128xbf16>
    %c0_2 = arith.constant 0 : index
    %c0_3 = arith.constant 0 : index
    %4 = vector.load %arg4[%c0_2, %c0_3] : memref<32x128xbf16, #tpu.memory_space<vmem>>, vector<32x128xbf16>
    %c0_4 = arith.constant 0 : index
    %c0_5 = arith.constant 0 : index
    %5 = vector.load %arg5[%c0_4, %c0_5] : memref<1x128xf32, #tpu.memory_space<vmem>>, vector<1x128xf32>
    %c0_i32_6 = arith.constant 0 : i32
    %c1_i32 = arith.constant 1 : i32
    %6 = arith.muli %c0_i32_6, %c1_i32 : i32
    %c0_i32_7 = arith.constant 0 : i32
    %7 = arith.addi %c0_i32_7, %6 : i32
    %8 = arith.index_cast %7 : i32 to index
    %c0_8 = arith.constant 0 : index
    %c0_9 = arith.constant 0 : index
    %9 = vector.load %arg2[%8, %c0_8, %c0_9] : memref<1x16x16xbf16, #tpu.memory_space<vmem>>, vector<1x16x16xbf16>
    %10 = vector.shape_cast %9 : vector<1x16x16xbf16> to vector<16x16xbf16>
    %cst = arith.constant dense<0.000000e+00> : vector<16x128xf32>
    %11 = tpu.matmul %10, %3, %cst {dimension_numbers = #tpu.dot_dimension_numbers<[1], [0], [0], [1], [0, 0, 1, 1], [], []>} : vector<16x16xbf16>, vector<16x128xbf16>, vector<16x128xf32> -> vector<16x128xf32>
    %12 = vector.broadcast %5 : vector<1x128xf32> to vector<16x128xf32>
    %13 = arith.addf %11, %12 : vector<16x128xf32>
    %14 = arith.index_cast %7 : i32 to index
    %c0_10 = arith.constant 0 : index
    %c0_11 = arith.constant 0 : index
    %15 = vector.load %arg11[%14, %c0_10, %c0_11] : memref<1x16x128xf32, #tpu.memory_space<vmem>>, vector<1x16x128xf32>
    %16 = vector.shape_cast %15 : vector<1x16x128xf32> to vector<16x128xf32>
    %17 = vector.shape_cast %13 : vector<16x128xf32> to vector<1x16x128xf32>
    tpu.vector_store %arg11[%14, %c0_10, %c0_11], %17 {strides = array<i32>} : memref<1x16x128xf32, #tpu.memory_space<vmem>>, vector<1x16x128xf32>,
    %c1_i32_12 = arith.constant 1 : i32
    %c0_13 = arith.constant 0 : index
    %c0_14 = arith.constant 0 : index
    %18 = vector.load %arg12[%c0_13, %c0_14] : memref<16x32xf32, #tpu.memory_space<vmem>>, vector<16x32xf32>
    %c0_15 = arith.constant 0 : index
    %c0_16 = arith.constant 0 : index
    %19 = vector.load %arg13[%c0_15, %c0_16] : memref<16x32xf32, #tpu.memory_space<vmem>>, vector<16x32xf32>
    %c0_i32_17 = arith.constant 0 : i32
    %20 = arith.index_cast %c0_i32_17 : i32 to index
    %c0_18 = arith.constant 0 : index
    %c0_19 = arith.constant 0 : index
    %21 = vector.load %arg11[%20, %c0_18, %c0_19] : memref<1x16x128xf32, #tpu.memory_space<vmem>>, vector<1x16x128xf32>
    %22 = vector.shape_cast %21 : vector<1x16x128xf32> to vector<16x128xf32>
    %23 = arith.truncf %18 : vector<16x32xf32> to vector<16x32xbf16>
    %cst_20 = arith.constant dense<0.000000e+00> : vector<16x128xf32>
    %24 = tpu.matmul %23, %4, %cst_20 {dimension_numbers = #tpu.dot_dimension_numbers<[1], [0], [0], [1], [0, 0, 1, 1], [], []>} : vector<16x32xbf16>, vector<32x128xbf16>, vector<16x128xf32> -> vector<16x128xf32>
    %25 = arith.addf %22, %24 : vector<16x128xf32>
    %26 = vector.extract_strided_slice %25 {offsets = [0, 0], sizes = [16, 32], strides = [1, 1]} : vector<16x128xf32> to vector<16x32xf32>
    %cst_21 = arith.constant 5.000000e-01 : f32
    %27 = vector.broadcast %cst_21 : f32 to vector<16x32xf32>
    %28 = arith.mulf %27, %26 : vector<16x32xf32>
    %29 = math.tanh %28 : vector<16x32xf32>
    %cst_22 = arith.constant 1.000000e+00 : f32
    %30 = vector.broadcast %cst_22 : f32 to vector<16x32xf32>
    %31 = arith.addf %29, %30 : vector<16x32xf32>
    %cst_23 = arith.constant 5.000000e-01 : f32
    %32 = vector.broadcast %cst_23 : f32 to vector<16x32xf32>
    %33 = arith.mulf %32, %31 : vector<16x32xf32>
    %34 = vector.extract_strided_slice %25 {offsets = [0, 32], sizes = [16, 32], strides = [1, 1]} : vector<16x128xf32> to vector<16x32xf32>
    %cst_24 = arith.constant 5.000000e-01 : f32
    %35 = vector.broadcast %cst_24 : f32 to vector<16x32xf32>
    %36 = arith.mulf %35, %34 : vector<16x32xf32>
    %37 = math.tanh %36 : vector<16x32xf32>
    %cst_25 = arith.constant 1.000000e+00 : f32
    %38 = vector.broadcast %cst_25 : f32 to vector<16x32xf32>
    %39 = arith.addf %37, %38 : vector<16x32xf32>
    %cst_26 = arith.constant 5.000000e-01 : f32
    %40 = vector.broadcast %cst_26 : f32 to vector<16x32xf32>
    %41 = arith.mulf %40, %39 : vector<16x32xf32>
    %42 = vector.extract_strided_slice %25 {offsets = [0, 64], sizes = [16, 32], strides = [1, 1]} : vector<16x128xf32> to vector<16x32xf32>
    %43 = math.tanh %42 : vector<16x32xf32>
    %44 = vector.extract_strided_slice %25 {offsets = [0, 96], sizes = [16, 32], strides = [1, 1]} : vector<16x128xf32> to vector<16x32xf32>
    %cst_27 = arith.constant 5.000000e-01 : f32
    %45 = vector.broadcast %cst_27 : f32 to vector<16x32xf32>
    %46 = arith.mulf %45, %44 : vector<16x32xf32>
    %47 = math.tanh %46 : vector<16x32xf32>
    %cst_28 = arith.constant 1.000000e+00 : f32
    %48 = vector.broadcast %cst_28 : f32 to vector<16x32xf32>
    %49 = arith.addf %47, %48 : vector<16x32xf32>
    %cst_29 = arith.constant 5.000000e-01 : f32
    %50 = vector.broadcast %cst_29 : f32 to vector<16x32xf32>
    %51 = arith.mulf %50, %49 : vector<16x32xf32>
    %52 = arith.mulf %41, %19 : vector<16x32xf32>
    %53 = arith.mulf %33, %43 : vector<16x32xf32>
    %54 = arith.addf %52, %53 : vector<16x32xf32>
    %55 = math.tanh %54 : vector<16x32xf32>
    %56 = arith.mulf %51, %55 : vector<16x32xf32>
    %57 = arith.index_cast %c0_i32_17 : i32 to index
    %c0_30 = arith.constant 0 : index
    %c0_31 = arith.constant 0 : index
    %58 = vector.load %arg8[%57, %c0_30, %c0_31] : memref<1x16x32xf32, #tpu.memory_space<vmem>>, vector<1x16x32xf32>
    %59 = vector.shape_cast %58 : vector<1x16x32xf32> to vector<16x32xf32>
    %60 = vector.shape_cast %56 : vector<16x32xf32> to vector<1x16x32xf32>
    tpu.vector_store %arg8[%57, %c0_30, %c0_31], %60 {strides = array<i32>} : memref<1x16x32xf32, #tpu.memory_space<vmem>>, vector<1x16x32xf32>,
    %c1_i32_32 = arith.constant 1 : i32
    %c0_33 = arith.constant 0 : index
    %c0_34 = arith.constant 0 : index
    %61 = vector.load %arg12[%c0_33, %c0_34] : memref<16x32xf32, #tpu.memory_space<vmem>>, vector<16x32xf32>
    tpu.vector_store %arg12[%c0_33, %c0_34], %56 {strides = array<i32>} : memref<16x32xf32, #tpu.memory_space<vmem>>, vector<16x32xf32>,
    %c0_35 = arith.constant 0 : index
    %c0_36 = arith.constant 0 : index
    %62 = vector.load %arg13[%c0_35, %c0_36] : memref<16x32xf32, #tpu.memory_space<vmem>>, vector<16x32xf32>
    tpu.vector_store %arg13[%c0_35, %c0_36], %54 {strides = array<i32>} : memref<16x32xf32, #tpu.memory_space<vmem>>, vector<16x32xf32>,
    %c0_i32_37 = arith.constant 0 : i32
    %63 = arith.cmpi eq, %arg1, %c0_i32_37 : i32
    %64 = arith.extui %63 : i1 to i32
    %c0_i32_38 = arith.constant 0 : i32
    %65 = arith.cmpi ne, %64, %c0_i32_38 : i32
    scf.if %65 {
      %c0_39 = arith.constant 0 : index
      %c0_40 = arith.constant 0 : index
      %66 = vector.load %arg9[%c0_39, %c0_40] : memref<16x32xf32, #tpu.memory_space<vmem>>, vector<16x32xf32>
      tpu.vector_store %arg9[%c0_39, %c0_40], %56 {strides = array<i32>} : memref<16x32xf32, #tpu.memory_space<vmem>>, vector<16x32xf32>,
      %c0_41 = arith.constant 0 : index
      %c0_42 = arith.constant 0 : index
      %67 = vector.load %arg10[%c0_41, %c0_42] : memref<16x32xf32, #tpu.memory_space<vmem>>, vector<16x32xf32>
      tpu.vector_store %arg10[%c0_41, %c0_42], %54 {strides = array<i32>} : memref<16x32xf32, #tpu.memory_space<vmem>>, vector<16x32xf32>,
    } else {
    }
    return
  }
  func.func @transform_0(%arg0: i32, %arg1: i32) -> (i32, i32, i32) {
    %c0_i32 = arith.constant 0 : i32
    %c0_i32_0 = arith.constant 0 : i32
    return %arg1, %arg0, %c0_i32 : i32, i32, i32
  }
  func.func @transform_1(%arg0: i32, %arg1: i32) -> (i32, i32) {
    %c0_i32 = arith.constant 0 : i32
    %c0_i32_0 = arith.constant 0 : i32
    %c0_i32_1 = arith.constant 0 : i32
    return %c0_i32, %c0_i32_0 : i32, i32
  }
  func.func @transform_2(%arg0: i32, %arg1: i32) -> (i32, i32) {
    %c0_i32 = arith.constant 0 : i32
    %c0_i32_0 = arith.constant 0 : i32
    %c0_i32_1 = arith.constant 0 : i32
    return %c0_i32, %c0_i32_0 : i32, i32
  }
  func.func @transform_3(%arg0: i32, %arg1: i32) -> (i32, i32) {
    %c0_i32 = arith.constant 0 : i32
    %c0_i32_0 = arith.constant 0 : i32
    %c0_i32_1 = arith.constant 0 : i32
    return %c0_i32, %c0_i32_0 : i32, i32
  }
  func.func @transform_4(%arg0: i32, %arg1: i32) -> (i32, i32) {
    %c0_i32 = arith.constant 0 : i32
    %c0_i32_0 = arith.constant 0 : i32
    return %arg0, %c0_i32 : i32, i32
  }
  func.func @transform_5(%arg0: i32, %arg1: i32) -> (i32, i32) {
    %c0_i32 = arith.constant 0 : i32
    %c0_i32_0 = arith.constant 0 : i32
    return %arg0, %c0_i32 : i32, i32
  }
  func.func @transform_6(%arg0: i32, %arg1: i32) -> (i32, i32, i32) {
    %c0_i32 = arith.constant 0 : i32
    %c0_i32_0 = arith.constant 0 : i32
    return %arg1, %arg0, %c0_i32 : i32, i32, i32
  }
  func.func @transform_7(%arg0: i32, %arg1: i32) -> (i32, i32) {
    %c0_i32 = arith.constant 0 : i32
    %c0_i32_0 = arith.constant 0 : i32
    return %arg0, %c0_i32 : i32, i32
  }
  func.func @transform_8(%arg0: i32, %arg1: i32) -> (i32, i32) {
    %c0_i32 = arith.constant 0 : i32
    %c0_i32_0 = arith.constant 0 : i32
    return %arg0, %c0_i32 : i32, i32
  }
}

</mosaic_0001>

<llo_original>
// kernel: _lstm_forward_impl.1
$region0: #{_lstm_forward_impl.1}
  #allocation0 [shape = 'u32[]', space=smem, size = 0x4, offset = 0x4, fixed_abs, tag = 'smem constant byte address 0x4 - core index']
  #allocation1 [shape = 'u32[144,128]{1,0:T(1,128)}', space=vmem, size = 0x12000, scoped, tag = 'internal scratch']
  #allocation2 [shape = 'f32[1,16,128]{2,1,0:T(8,128)}', space=vmem, size = 0x2000, scoped, tag = 'scratch operand']
  #allocation3 [shape = 'f32[16,32]{1,0:T(8,128)}', space=vmem, size = 0x2000, scoped, tag = 'scratch operand']
  #allocation4 [shape = 'f32[16,32]{1,0:T(8,128)}', space=vmem, size = 0x2000, scoped, tag = 'scratch operand']
  %s0 = inlined_call_operand.vmem [shape: bf16[1,16,16], index: 0, kind: input, shape index: {}]
  %s1 = inlined_call_operand.hbm [shape: bf16[16,128], index: 1, kind: input, shape index: {}]
  %s2 = inlined_call_operand.vmem [shape: bf16[32,128], index: 2, kind: input, shape index: {}]
  %s3 = inlined_call_operand.vmem [shape: f32[1,128], index: 3, kind: input, shape index: {}]
  %s4 = inlined_call_operand.vmem [shape: f32[16,32], index: 4, kind: input, shape index: {}]
  %s5 = inlined_call_operand.hbm [shape: f32[16,32], index: 5, kind: input, shape index: {}]
  %s6 = inlined_call_operand.hbm [shape: f32[1,16,32], index: 6, kind: output, shape index: {0}]
  %s7 = inlined_call_operand.hbm [shape: f32[16,32], index: 7, kind: output, shape index: {1}]
  %s8 = inlined_call_operand.hbm [shape: f32[16,32], index: 8, kind: output, shape index: {2}]
  %9 = xla_tuple %s6, %s7, %s8
  %s10 = sld [smem:[#allocation0]]
  $region66: #{_lstm_forward_impl.1} parent=0
    _
  %s12 = ssub.s32 1, %s10
  %s13 = scalar_select 0, %s12, %s10
  $region1: #{_lstm_forward_impl.1} parent=0
    #allocation5 [shape = 'u8[4096]{0}', space=vmem, size = 0x1000, scoped, tag = 'input window, operand 1, single buffered']
    #allocation6 [shape = 's32[1]{0}', space=sflag, size = 0x4, scoped, tag = 'scoped memory for _lstm_forward_impl.1']
    #allocation7 [shape = 's32[1]{0}', space=sflag, size = 0x4, scoped, tag = 'scoped memory for _lstm_forward_impl.1']
    #allocation8 [shape = 'u8[8192]{0}', space=vmem, size = 0x2000, scoped, tag = 'input window, operand 5, single buffered']
    #allocation9 [shape = 's32[1]{0}', space=sflag, size = 0x4, scoped, tag = 'scoped memory for _lstm_forward_impl.1']
    #allocation10 [shape = 'u8[8192]{0}', space=vmem, size = 0x2000, scoped, tag = 'output window, operand 0, single buffered']
    #allocation11 [shape = 'u8[8192]{0}', space=vmem, size = 0x2000, scoped, tag = 'output window, operand 1, single buffered']
    #allocation12 [shape = 's32[1]{0}', space=sflag, size = 0x4, scoped, tag = 'scoped memory for _lstm_forward_impl.1']
    #allocation13 [shape = 'u8[8192]{0}', space=vmem, size = 0x2000, scoped, tag = 'output window, operand 2, single buffered']
    %14 = vsyncpa [#allocation6], 0
    %15 = vsyncpa [#allocation9], 0
    %16 = vsyncpa [#allocation7], 0
    %17 = vsyncpa [#allocation12], 0
    // Predicated region
    $region2: #{_lstm_forward_impl.1} parent=1 // pred_check
      _
    $region3: #{_lstm_forward_impl.1} parent=1 // pred_check_branch
      %19 = sbr.rel (0) target = $region5
    $region4: #{_lstm_forward_impl.1} parent=1 // pred_region
      _
    $region5: #{_lstm_forward_impl.1} parent=1 // pred_fallthru
      _
    // Predicated region
    $region6: #{_lstm_forward_impl.1} parent=1 // pred_check
      _
    $region7: #{_lstm_forward_impl.1} parent=1 // pred_check_branch
      %21 = sbr.rel (0) target = $region9
    $region8: #{_lstm_forward_impl.1} parent=1 // pred_region
      %s23 = ssub.s32 128, 128
      %24 = vsyncadd [#allocation6], %s23
      %s25 = sshll.u32 [#allocation5], 4
      %s26 = int_to_ptr.vmem [resolvable:$true] %s25
      %31 = dma.hbm_to_vmem [thread:$0]  %s1, 128, %s26, [#allocation6], 64, 64, 4
    $region9: #{_lstm_forward_impl.1} parent=1 // pred_fallthru
      _
    // Predicated region
    $region10: #{_lstm_forward_impl.1} parent=1 // pred_check
      _
    $region11: #{_lstm_forward_impl.1} parent=1 // pred_check_branch
      %33 = sbr.rel (0) target = $region13
    $region12: #{_lstm_forward_impl.1} parent=1 // pred_region
      _
    $region13: #{_lstm_forward_impl.1} parent=1 // pred_fallthru
      _
    // Predicated region
    $region14: #{_lstm_forward_impl.1} parent=1 // pred_check
      _
    $region15: #{_lstm_forward_impl.1} parent=1 // pred_check_branch
      %35 = sbr.rel (0) target = $region17
    $region16: #{_lstm_forward_impl.1} parent=1 // pred_region
      _
    $region17: #{_lstm_forward_impl.1} parent=1 // pred_fallthru
      _
    // Predicated region
    $region18: #{_lstm_forward_impl.1} parent=1 // pred_check
      _
    $region19: #{_lstm_forward_impl.1} parent=1 // pred_check_branch
      %37 = sbr.rel (0) target = $region21
    $region20: #{_lstm_forward_impl.1} parent=1 // pred_region
      _
    $region21: #{_lstm_forward_impl.1} parent=1 // pred_fallthru
      _
    // Predicated region
    $region22: #{_lstm_forward_impl.1} parent=1 // pred_check
      _
    $region23: #{_lstm_forward_impl.1} parent=1 // pred_check_branch
      %39 = sbr.rel (0) target = $region25
    $region24: #{_lstm_forward_impl.1} parent=1 // pred_region
      %s41 = ssub.s32 256, 256
      %42 = vsyncadd [#allocation9], %s41
      %s43 = sshll.u32 [#allocation8], 4
      %s44 = int_to_ptr.vmem [resolvable:$true] %s43
      %49 = dma.hbm_to_vmem [thread:$0]  %s5, 256, %s44, [#allocation9], 128, 128, 8
    $region25: #{_lstm_forward_impl.1} parent=1 // pred_fallthru
      _
    // Predicated region
    $region26: #{_lstm_forward_impl.1} parent=1 // pred_check
      _
    $region27: #{_lstm_forward_impl.1} parent=1 // pred_check_branch
      %51 = sbr.rel (0) target = $region29
    $region28: #{_lstm_forward_impl.1} parent=1 // pred_region
      %52 = dma.done [#allocation6], 128
    $region29: #{_lstm_forward_impl.1} parent=1 // pred_fallthru
      _
    // Predicated region
    $region30: #{_lstm_forward_impl.1} parent=1 // pred_check
      _
    $region31: #{_lstm_forward_impl.1} parent=1 // pred_check_branch
      %54 = sbr.rel (0) target = $region33
    $region32: #{_lstm_forward_impl.1} parent=1 // pred_region
      %55 = dma.done [#allocation9], 256
    $region33: #{_lstm_forward_impl.1} parent=1 // pred_fallthru
      _
    %p57 = scmp.eq.s32.totalorder 0, 0
    // Predicated region
    $region34: #{_lstm_forward_impl.1} parent=1 // pred_check
      %p58 = pneg %p57
    $region35: #{_lstm_forward_impl.1} parent=1 // pred_check_branch
      %60 = sbr.rel (%p58) target = $region37
    $region36: #{_lstm_forward_impl.1} parent=1 // pred_region
      %v61 = vld [vmem:[%s4] sm:$0xff]
      %v62 = vld [vmem:[%s4 + $0x8] sm:$0xff]
      %vm63 = vcmask 261120
      %64 = vst.msk [vmem:[#allocation3] sm:$0xff] %vm63, %v61
      %65 = vst.msk [vmem:[#allocation3 + $0x8] sm:$0xff] %vm63, %v62
      %v66 = vld [vmem:[#allocation8] sm:$0xff]
      %v67 = vld [vmem:[#allocation8 + $0x8] sm:$0xff]
      %68 = vst.msk [vmem:[#allocation4] sm:$0xff] %vm63, %v66
      %69 = vst.msk [vmem:[#allocation4 + $0x8] sm:$0xff] %vm63, %v67
    $region37: #{_lstm_forward_impl.1} parent=1 // pred_fallthru
      _
    %v70 = vld [vmem:[#allocation5] sm:$0xf]
    %v71 = vld [vmem:[#allocation5 + $0x4] sm:$0xf]
    %v72 = vld [vmem:[%s2] sm:$0xf]
    %v73 = vld [vmem:[%s2 + $0x4] sm:$0xf]
    %v74 = vld [vmem:[%s2 + $0x8] sm:$0xf]
    %v75 = vld [vmem:[%s2 + $0xc] sm:$0xf]
    %v76 = vld [vmem:[%s3] sm:$0x1]
    %v77 = vld [vmem:[%s0] sm:$0xf]
    %v78 = vld [vmem:[%s0 + $0x4] sm:$0xf]
    %v80 = vlaneseq
    %v81 = vshrl.u32 %v80, 7
    %v82 = vsub.s32 0, %v81
    %v83 = vrot.slane %v76, %v82
    %v87 = vunpack.c.l.b16 %v77
    %v88 = vunpack.c.l.b16 %v78
    %v89 = vpack.c.b16 %v88, %v87
    %v92 = vunpack.c.l.b16 %v70
    %v93 = vunpack.c.l.b16 %v71
    %v94 = vpack.c.b16 %v93, %v92
    %vm96 = vcmask 130048
    %v98 = vsel %vm96, %v89, 0
    %100 = vmatprep.subr.bf16.mxu0 0
    %101 = vmatpush1.bf16.msra.mxu0 %v94
    %102 = vmatprep.subr.bf16.mxu0 0
    %103 = vmatpush1.bf16.msra.mxu0 0
    %104 = vmatprep.subr.bf16.mxu0 0
    %105 = vmatpush1.bf16.msra.mxu0 0
    %106 = vmatprep.subr.bf16.mxu0 0
    %107 = vmatpush1.bf16.msra.mxu0 0
    %108 = vmatprep.subr.bf16.mxu0 0
    %109 = vmatpush1.bf16.msra.mxu0 0
    %110 = vmatprep.subr.bf16.mxu0 0
    %111 = vmatpush1.bf16.msra.mxu0 0
    %112 = vmatprep.subr.bf16.mxu0 0
    %113 = vmatpush1.bf16.msra.mxu0 0
    %114 = vmatprep.subr.bf16.mxu0 0
    %115 = vmatpush1.bf16.msra.mxu0 0
    %116 = vmatprep.subr.bf16.mxu0 0
    %117 = vmatpush1.bf16.msra.mxu0 0
    %118 = vmatprep.subr.bf16.mxu0 0
    %119 = vmatpush1.bf16.msra.mxu0 0
    %120 = vmatprep.subr.bf16.mxu0 0
    %121 = vmatpush1.bf16.msra.mxu0 0
    %122 = vmatprep.subr.bf16.mxu0 0
    %123 = vmatpush1.bf16.msra.mxu0 0
    %124 = vmatprep.subr.bf16.mxu0 0
    %125 = vmatpush1.bf16.msra.mxu0 0
    %126 = vmatprep.subr.bf16.mxu0 0
    %127 = vmatpush1.bf16.msra.mxu0 0
    %128 = vmatprep.subr.bf16.mxu0 0
    %129 = vmatpush1.bf16.msra.mxu0 0
    %130 = vmatprep.subr.bf16.mxu0 0
    %131 = vmatpush1.bf16.msra.mxu0 0
    %132 = vmatprep.mubr.bf16.mxu0 0
    %133 = vmatmul.mubr.bf16.gmra.mrb[0].mxu0 %v98
    %v134 = vpop.f32.mrb[0].mxu0
    %v135 = vadd.f32 %v83, %v134
    %v136 = vpop.f32.mrb[0].mxu0
    %v137 = vpop.f32.mrb[0].mxu0
    %v138 = vadd.f32 %v83, %v137
    %v139 = vpop.f32.mrb[0].mxu0
    %140 = vdwg.mxu0
    %141 = vst [vmem:[#allocation2] sm:$0xff] %v135
    %142 = vst [vmem:[#allocation2 + $0x8] sm:$0xff] %v138
    %v143 = vld [vmem:[#allocation3] sm:$0xff]
    %v144 = vld [vmem:[#allocation3 + $0x8] sm:$0xff]
    %v145 = vld [vmem:[#allocation4] sm:$0xff]
    %v146 = vld [vmem:[#allocation4 + $0x8] sm:$0xff]
    %v147 = vld [vmem:[#allocation2] sm:$0xff]
    %v148 = vld [vmem:[#allocation2 + $0x8] sm:$0xff]
    %v149 = vpack.c.bf16 %v144, %v143
    %v154 = vunpack.c.l.b16 %v72
    %v155 = vunpack.c.l.b16 %v73
    %v156 = vunpack.c.l.b16 %v74
    %v157 = vunpack.c.l.b16 %v75
    %v158 = vpack.c.b16 %v155, %v154
    %v159 = vpack.c.b16 %v157, %v156
    %vm162 = vcmask 261120
    %v164 = vsel %vm162, %v149, 0
    %166 = vmatprep.subr.bf16.mxu0 0
    %167 = vmatpush1.bf16.msra.mxu0 %v158
    %168 = vmatprep.subr.bf16.mxu0 0
    %169 = vmatpush1.bf16.msra.mxu0 %v159
    %170 = vmatprep.subr.bf16.mxu0 0
    %171 = vmatpush1.bf16.msra.mxu0 0
    %172 = vmatprep.subr.bf16.mxu0 0
    %173 = vmatpush1.bf16.msra.mxu0 0
    %174 = vmatprep.subr.bf16.mxu0 0
    %175 = vmatpush1.bf16.msra.mxu0 0
    %176 = vmatprep.subr.bf16.mxu0 0
    %177 = vmatpush1.bf16.msra.mxu0 0
    %178 = vmatprep.subr.bf16.mxu0 0
    %179 = vmatpush1.bf16.msra.mxu0 0
    %180 = vmatprep.subr.bf16.mxu0 0
    %181 = vmatpush1.bf16.msra.mxu0 0
    %182 = vmatprep.subr.bf16.mxu0 0
    %183 = vmatpush1.bf16.msra.mxu0 0
    %184 = vmatprep.subr.bf16.mxu0 0
    %185 = vmatpush1.bf16.msra.mxu0 0
    %186 = vmatprep.subr.bf16.mxu0 0
    %187 = vmatpush1.bf16.msra.mxu0 0
    %188 = vmatprep.subr.bf16.mxu0 0
    %189 = vmatpush1.bf16.msra.mxu0 0
    %190 = vmatprep.subr.bf16.mxu0 0
    %191 = vmatpush1.bf16.msra.mxu0 0
    %192 = vmatprep.subr.bf16.mxu0 0
    %193 = vmatpush1.bf16.msra.mxu0 0
    %194 = vmatprep.subr.bf16.mxu0 0
    %195 = vmatpush1.bf16.msra.mxu0 0
    %196 = vmatprep.subr.bf16.mxu0 0
    %197 = vmatpush1.bf16.msra.mxu0 0
    %198 = vmatprep.mubr.bf16.mxu0 0
    %199 = vmatmul.mubr.bf16.gmra.mrb[0].mxu0 %v164
    %v200 = vpop.f32.mrb[0].mxu0
    %v201 = vadd.f32 0.0, %v200
    %v202 = vpop.f32.mrb[0].mxu0
    %v203 = vpop.f32.mrb[0].mxu0
    %v204 = vadd.f32 0.0, %v203
    %v205 = vpop.f32.mrb[0].mxu0
    %206 = vdwg.mxu0
    %v207 = vadd.f32 %v147, %v201
    %v208 = vadd.f32 %v148, %v204
    %v209 = vmul.f32 %v207, 0.5
    %v210 = vmul.f32 %v208, 0.5
    %v211 = vtanh.pop %v209
    %v212 = vtanh.pop %v210
    %v213 = vadd.f32 %v211, 1.0
    %v214 = vadd.f32 %v212, 1.0
    %v215 = vmul.f32 %v213, 0.5
    %v216 = vmul.f32 %v214, 0.5
    %v217 = vtanh.pop %v207
    %v218 = vtanh.pop %v208
    %221 = vrot.lane.b32.xlu0 %v145, 32
    %v222 = vpop.permute.xlu0 %221
    %223 = vrot.lane.b32.xlu0 %v146, 32
    %v224 = vpop.permute.xlu0 %223
    %v227 = vmul.f32 %v215, %v222
    %v228 = vmul.f32 %v216, %v224
    %231 = vrot.lane.b32.xlu0 %v217, 64
    %v232 = vpop.permute.xlu0 %231
    %233 = vrot.lane.b32.xlu0 %v218, 64
    %v234 = vpop.permute.xlu0 %233
    %v237 = vmul.f32 %v215, %v232
    %v238 = vmul.f32 %v216, %v234
    %241 = vrot.lane.b32.xlu0 %v237, 32
    %v242 = vpop.permute.xlu0 %241
    %243 = vrot.lane.b32.xlu0 %v238, 32
    %v244 = vpop.permute.xlu0 %243
    %v247 = vadd.f32 %v227, %v242
    %v248 = vadd.f32 %v228, %v244
    %v249 = vtanh.pop %v247
    %v250 = vtanh.pop %v248
    %253 = vrot.lane.b32.xlu0 %v249, 64
    %v254 = vpop.permute.xlu0 %253
    %255 = vrot.lane.b32.xlu0 %v250, 64
    %v256 = vpop.permute.xlu0 %255
    %v259 = vmul.f32 %v215, %v254
    %v260 = vmul.f32 %v216, %v256
    %263 = vrot.lane.b32.xlu0 %v259, 32
    %v264 = vpop.permute.xlu0 %263
    %265 = vrot.lane.b32.xlu0 %v260, 32
    %v266 = vpop.permute.xlu0 %265
    %269 = vst.msk [vmem:[#allocation10] sm:$0xff] %vm162, %v264
    %270 = vst.msk [vmem:[#allocation10 + $0x8] sm:$0xff] %vm162, %v266
    %271 = vst.msk [vmem:[#allocation3] sm:$0xff] %vm162, %v264
    %272 = vst.msk [vmem:[#allocation3 + $0x8] sm:$0xff] %vm162, %v266
    %275 = vrot.lane.b32.xlu0 %v247, 96
    %v276 = vpop.permute.xlu0 %275
    %277 = vrot.lane.b32.xlu0 %v248, 96
    %v278 = vpop.permute.xlu0 %277
    %281 = vst.msk [vmem:[#allocation4] sm:$0xff] %vm162, %v276
    %282 = vst.msk [vmem:[#allocation4 + $0x8] sm:$0xff] %vm162, %v278
    // Predicated region
    $region38: #{_lstm_forward_impl.1} parent=1 // pred_check
      %p283 = pneg %p57
    $region39: #{_lstm_forward_impl.1} parent=1 // pred_check_branch
      %285 = sbr.rel (%p283) target = $region41
    $region40: #{_lstm_forward_impl.1} parent=1 // pred_region
      %286 = vst.msk [vmem:[#allocation11] sm:$0xff] %vm162, %v264
      %287 = vst.msk [vmem:[#allocation11 + $0x8] sm:$0xff] %vm162, %v266
      %288 = vst.msk [vmem:[#allocation13] sm:$0xff] %vm162, %v276
      %289 = vst.msk [vmem:[#allocation13 + $0x8] sm:$0xff] %vm162, %v278
    $region41: #{_lstm_forward_impl.1} parent=1 // pred_fallthru
      _
    // Predicated region
    $region42: #{_lstm_forward_impl.1} parent=1 // pred_check
      _
    $region43: #{_lstm_forward_impl.1} parent=1 // pred_check_branch
      %291 = sbr.rel (0) target = $region45
    $region44: #{_lstm_forward_impl.1} parent=1 // pred_region
      %s293 = ssub.s32 256, 256
      %294 = vsyncadd [#allocation7], %s293
      %s295 = sshll.u32 [#allocation10], 4
      %s296 = int_to_ptr.vmem [resolvable:$true] %s295
      %301 = dma.vmem_to_hbm [thread:$0]  %s296, 256, %s6, [#allocation7], 128, 128, 8
    $region45: #{_lstm_forward_impl.1} parent=1 // pred_fallthru
      _
    // Predicated region
    $region46: #{_lstm_forward_impl.1} parent=1 // pred_check
      _
    $region47: #{_lstm_forward_impl.1} parent=1 // pred_check_branch
      %303 = sbr.rel (0) target = $region49
    $region48: #{_lstm_forward_impl.1} parent=1 // pred_region
      %s305 = ssub.s32 256, 256
      %306 = vsyncadd [#allocation12], %s305
      %s307 = sshll.u32 [#allocation11], 4
      %s308 = int_to_ptr.vmem [resolvable:$true] %s307
      %313 = dma.vmem_to_hbm [thread:$0]  %s308, 256, %s7, [#allocation12], 128, 128, 8
    $region49: #{_lstm_forward_impl.1} parent=1 // pred_fallthru
      _
    // Predicated region
    $region50: #{_lstm_forward_impl.1} parent=1 // pred_check
      _
    $region51: #{_lstm_forward_impl.1} parent=1 // pred_check_branch
      %315 = sbr.rel (0) target = $region53
    $region52: #{_lstm_forward_impl.1} parent=1 // pred_region
      %s317 = ssub.s32 256, 256
      %318 = vsyncadd [#allocation12], %s317
      %s319 = sshll.u32 [#allocation13], 4
      %s320 = int_to_ptr.vmem [resolvable:$true] %s319
      %325 = dma.vmem_to_hbm [thread:$0]  %s320, 256, %s8, [#allocation12], 128, 128, 8
    $region53: #{_lstm_forward_impl.1} parent=1 // pred_fallthru
      _
    // Predicated region
    $region54: #{_lstm_forward_impl.1} parent=1 // pred_check
      _
    $region55: #{_lstm_forward_impl.1} parent=1 // pred_check_branch
      %327 = sbr.rel (0) target = $region57
    $region56: #{_lstm_forward_impl.1} parent=1 // pred_region
      %328 = dma.done [#allocation7], 256
    $region57: #{_lstm_forward_impl.1} parent=1 // pred_fallthru
      _
    // Predicated region
    $region58: #{_lstm_forward_impl.1} parent=1 // pred_check
      _
    $region59: #{_lstm_forward_impl.1} parent=1 // pred_check_branch
      %330 = sbr.rel (0) target = $region61
    $region60: #{_lstm_forward_impl.1} parent=1 // pred_region
      %331 = dma.done [#allocation12], 256
    $region61: #{_lstm_forward_impl.1} parent=1 // pred_fallthru
      _
    // Predicated region
    $region62: #{_lstm_forward_impl.1} parent=1 // pred_check
      _
    $region63: #{_lstm_forward_impl.1} parent=1 // pred_check_branch
      %333 = sbr.rel (0) target = $region65
    $region64: #{_lstm_forward_impl.1} parent=1 // pred_region
      %334 = dma.done [#allocation12], 256
    $region65: #{_lstm_forward_impl.1} parent=1 // pred_fallthru
      _
    %335 = vsyncpa [#allocation6], 1
    %336 = vsyncpa [#allocation9], 1
    %337 = vsyncpa [#allocation7], 1
    %338 = vsyncpa [#allocation12], 1

</llo_original>
